<compile_context>
chip_gen: v6e
topology: v6e:2x2x1
jax: 0.10.0
libtpu: 0.0.40
codegen_flags: <defaults>
</compile_context>

<pallas_src>
import math

import jax
import jax.numpy as jnp
import numpy as np
from jax.experimental import pallas as pl
from jax.experimental.pallas import tpu as pltpu

HIDDEN = 32
LOG2PI = math.log(2.0 * math.pi)


def _fused_actor_critic_kernel(sa_ref, w1t_ref, b1t_ref, w2t_ref, b2t_ref,
                               w3t_ref, b3t_ref, consts_ref, out_ref):
    """One batch tile, feature-major (lane-dense) orientation.

    sa_ref    : [S+A, TB]   rows 0..S-1 = state, rows S..S+A-1 = action
    w1t [2H,S], b1t [2H,1], w2t [2H,2H] (block-diag), b2t [2H,1],
    w3t [A+1,2H] (block-diag), b3t [A+1,1]
    consts_ref: [A+1, 1] = [ 1/var (A rows) ; logp_const (1 row) ]
    out_ref   : [2, TB]   row 0 = log_prob, row 1 = value
    """
    S = w1t_ref.shape[1]
    A = consts_ref.shape[0] - 1

    sa = sa_ref[...]                       # [S+A, TB]
    x_t = sa[:S, :]                        # [S, TB]
    a_t = sa[S:S + A, :]                   # [A, TB]

    # Fused actor+critic trunk: 3 matmuls, batch on the lane (N) side.
    h = jnp.dot(w1t_ref[...], x_t, preferred_element_type=jnp.float32) + b1t_ref[...]
    h = jnp.maximum(h, 0.0)                # [2H, TB]
    h = jnp.dot(w2t_ref[...], h, preferred_element_type=jnp.float32) + b2t_ref[...]
    h = jnp.maximum(h, 0.0)                # [2H, TB]
    y = jnp.dot(w3t_ref[...], h, preferred_element_type=jnp.float32) + b3t_ref[...]
    # y: [A+1, TB]; rows 0..A-1 = actor pre-tanh, row A = critic value.

    mean = jnp.tanh(y[:A, :])              # [A, TB]
    value = y[A:A + 1, :]                  # [1, TB]

    inv_var = consts_ref[:A, :]            # [A, 1], broadcast along lanes
    logp_const = consts_ref[A:A + 1, :]    # [1, 1]

    diff = a_t - mean
    maha = jnp.sum(diff * diff * inv_var, axis=0, keepdims=True)   # [1, TB]
    logp = logp_const - 0.5 * maha                                  # [1, TB]

    # Single lane-dense store of the whole [2, TB] block.
    out_ref[...] = jnp.concatenate([logp, value], axis=0)


def pack_params(params, action_dim):
    """One-time host-side fusion into 3 (transposed) block-diagonal matmuls."""
    H = HIDDEN
    w1 = jnp.concatenate([params["aw1"], params["cw1"]], axis=1)            # [S, 2H]
    b1 = jnp.concatenate([params["ab1"], params["cb1"]], axis=1)            # [1, 2H]
    w2 = jnp.zeros((2 * H, 2 * H), jnp.float32)
    w2 = w2.at[:H, :H].set(params["aw2"]).at[H:, H:].set(params["cw2"])     # [2H, 2H]
    b2 = jnp.concatenate([params["ab2"], params["cb2"]], axis=1)            # [1, 2H]
    w3 = jnp.zeros((2 * H, action_dim + 1), jnp.float32)
    w3 = w3.at[:H, :action_dim].set(params["aw3"]).at[H:, action_dim:].set(params["cw3"])
    b3 = jnp.concatenate([params["ab3"], params["cb3"]], axis=1)            # [1, A+1]
    # Transposed (feature-major) copies for the lane-dense kernel.
    return (w1.T, b1.T, w2.T, b2.T, w3.T, b3.T)


def _pick_block_b(batch):
    """Large tiles (amortize ~0.35us/step), but keep >=2 grid steps for v7x."""
    if batch <= 128:
        return batch                       # full-array block (exempt from /128 rule)
    half = pl.cdiv(batch, 2)
    return min(2048, ((half + 127) // 128) * 128)


def actor_critic_evaluate(state, action, packed_t, action_var):
    """Pallas equivalent of ActorCritic.evaluate(state, action).

    Returns (action_logprobs [B], state_value [B], dist_entropy [B]).
    """
    B, S = state.shape
    A = action.shape[-1]
    w1t, b1t, w2t, b2t, w3t, b3t = packed_t
    H2 = w2t.shape[0]

    # Per-call constants: 1/var, log|Sigma|, log_prob constant, entropy scalar.
    action_var = action_var.astype(jnp.float32)
    inv_var = 1.0 / action_var
    log_det = jnp.sum(jnp.log(action_var))
    logp_const = -0.5 * (A * LOG2PI + log_det)
    consts = jnp.concatenate([inv_var, logp_const[None]]).reshape(A + 1, 1)

    # Single lane-dense [S+A, B] input stream (concat + transpose host-side).
    sa_t = jnp.concatenate([state, action], axis=1).T                       # [S+A, B]

    block_b = _pick_block_b(B)
    grid = (pl.cdiv(B, block_b),)

    flops = 2 * B * (H2 * S + H2 * H2 + H2 * (A + 1)) + 10 * B * A
    bytes_accessed = 4 * (B * (S + A + 2)
                          + H2 * S + H2 * H2 + H2 * (A + 1)
                          + 2 * H2 + 2 * (A + 1))
    cost = pl.CostEstimate(flops=flops, transcendentals=B * A,
                           bytes_accessed=bytes_accessed)

    out = pl.pallas_call(
        _fused_actor_critic_kernel,
        out_shape=jax.ShapeDtypeStruct((2, B), jnp.float32),
        grid_spec=pltpu.PrefetchScalarGridSpec(
            num_scalar_prefetch=0,
            grid=grid,
            in_specs=[
                # batch-blocked, pipelined, lane-dense input
                pl.BlockSpec((S + A, block_b), lambda i: (0, i)),
                # fused weights/biases: whole-array, VMEM-resident across steps
                pl.BlockSpec(w1t.shape, lambda i: (0, 0)),
                pl.BlockSpec(b1t.shape, lambda i: (0, 0)),
                pl.BlockSpec(w2t.shape, lambda i: (0, 0)),
                pl.BlockSpec(b2t.shape, lambda i: (0, 0)),
                pl.BlockSpec(w3t.shape, lambda i: (0, 0)),
                pl.BlockSpec(b3t.shape, lambda i: (0, 0)),
                pl.BlockSpec((A + 1, 1), lambda i: (0, 0)),
            ],
            # lane-dense output: (2, B) blocked along the batch (lane) axis
            out_specs=pl.BlockSpec((2, block_b), lambda i: (0, i)),
        ),
        compiler_params=pltpu.CompilerParams(
            dimension_semantics=("parallel",),
            vmem_limit_bytes=32 * 1024 * 1024,   # safe on v7x's 64 MiB too
        ),
        cost_estimate=cost,
    )(sa_t, w1t, b1t, w2t, b2t, w3t, b3t, consts)

    logp = out[0, :]
    value = out[1, :]
    # Entropy of a diagonal MVN is constant per call -> computed in the wrapper.
    entropy = jnp.full((B,), 0.5 * A * (1.0 + LOG2PI) + 0.5 * log_det,
                       dtype=jnp.float32)
    return logp, value, entropy


def init_params(key, state_dim, action_dim):
    """Deterministic init mimicking nn.Linear's U(-1/sqrt(fan_in), +1/sqrt(fan_in))."""
    def linear(k, fan_in, fan_out):
        bound = 1.0 / math.sqrt(fan_in)
        kw, kb = jax.random.split(k)
        w = jax.random.uniform(kw, (fan_in, fan_out), jnp.float32, -bound, bound)
        b = jax.random.uniform(kb, (1, fan_out), jnp.float32, -bound, bound)
        return w, b

    keys = jax.random.split(key, 6)
    aw1, ab1 = linear(keys[0], state_dim, HIDDEN)
    aw2, ab2 = linear(keys[1], HIDDEN, HIDDEN)
    aw3, ab3 = linear(keys[2], HIDDEN, action_dim)
    cw1, cb1 = linear(keys[3], state_dim, HIDDEN)
    cw2, cb2 = linear(keys[4], HIDDEN, HIDDEN)
    cw3, cb3 = linear(keys[5], HIDDEN, 1)
    return dict(aw1=aw1, ab1=ab1, aw2=aw2, ab2=ab2, aw3=aw3, ab3=ab3,
                cw1=cw1, cb1=cb1, cw2=cw2, cb2=cb2, cw3=cw3, cb3=cb3)


def reference_evaluate(state, action, params, action_var):
    """Pure-JAX reference (unfused weights) for correctness checking."""
    h = jnp.maximum(state @ params["aw1"] + params["ab1"], 0.0)
    h = jnp.maximum(h @ params["aw2"] + params["ab2"], 0.0)
    mean = jnp.tanh(h @ params["aw3"] + params["ab3"])

    c = jnp.maximum(state @ params["cw1"] + params["cb1"], 0.0)
    c = jnp.maximum(c @ params["cw2"] + params["cb2"], 0.0)
    value = (c @ params["cw3"] + params["cb3"])[:, 0]

    d = action.shape[-1]
    log_det = jnp.sum(jnp.log(action_var))
    diff = action - mean
    maha = jnp.sum(diff * diff / action_var, axis=-1)
    logp = -0.5 * (maha + d * LOG2PI + log_det)
    ent = jnp.full((state.shape[0],), 0.5 * d * (1.0 + LOG2PI) + 0.5 * log_det)
    return logp, value, ent


# TODO(synk): act()'s MultivariateNormal.sample() and the Memory bookkeeping are
# host-side control flow / RNG sampling outside the evaluate() hot path; not
# implemented as a kernel.

if __name__ == "__main__":
    # Small shapes consistent with the module: state_dim=16, action_dim=4;
    # batch large enough to exercise the batch grid (block_b=256 -> 2 tiles).
    B, STATE_DIM, ACTION_DIM = 512, 16, 4
    ACTION_STD = 0.5

    key = jax.random.PRNGKey(0)
    k_params, k_state, k_action = jax.random.split(key, 3)

    params = init_params(k_params, STATE_DIM, ACTION_DIM)
    packed_t = pack_params(params, ACTION_DIM)
    action_var = jnp.full((ACTION_DIM,), ACTION_STD * ACTION_STD, jnp.float32)

    state = jax.random.normal(k_state, (B, STATE_DIM), jnp.float32)
    action = jax.random.normal(k_action, (B, ACTION_DIM), jnp.float32)

    logp, value, ent = actor_critic_evaluate(state, action, packed_t, action_var)
    jax.block_until_ready((logp, value, ent))

    ref_logp, ref_value, ref_ent = reference_evaluate(state, action, params, action_var)
    np.testing.assert_allclose(np.asarray(logp), np.asarray(ref_logp), rtol=1e-5, atol=1e-4)
    np.testing.assert_allclose(np.asarray(value), np.asarray(ref_value), rtol=1e-5, atol=1e-4)
    np.testing.assert_allclose(np.asarray(ent), np.asarray(ref_ent), rtol=1e-5, atol=1e-4)

    print("KERNEL_OK")
</pallas_src>

<mosaic_0001>
module attributes {stable_mosaic.version = 11 : i64} {
  func.func @_fused_actor_critic_kernel(%arg0: i32, %arg1: memref<20x256xf32, #tpu.memory_space<vmem>>, %arg2: memref<64x16xf32, #tpu.memory_space<vmem>>, %arg3: memref<64x1xf32, #tpu.memory_space<vmem>>, %arg4: memref<64x64xf32, #tpu.memory_space<vmem>>, %arg5: memref<64x1xf32, #tpu.memory_space<vmem>>, %arg6: memref<5x64xf32, #tpu.memory_space<vmem>>, %arg7: memref<5x1xf32, #tpu.memory_space<vmem>>, %arg8: memref<5x1xf32, #tpu.memory_space<vmem>>, %arg9: memref<2x256xf32, #tpu.memory_space<vmem>>) attributes {dimension_semantics = [#tpu.dimension_semantics<parallel>], iteration_bounds = array<i64: 2>, scalar_prefetch = 0 : i64, scratch_operands = 0 : i64, tpu.core_type = #tpu.core_type<tc>, window_params = [{transform_indices = @transform_0, window_bounds = array<i64: 20, 256>}, {pipeline_mode = #tpu.pipeline_mode<synchronous>, transform_indices = @transform_1, window_bounds = array<i64: 64, 16>}, {pipeline_mode = #tpu.pipeline_mode<synchronous>, transform_indices = @transform_2, window_bounds = array<i64: 64, 1>}, {pipeline_mode = #tpu.pipeline_mode<synchronous>, transform_indices = @transform_3, window_bounds = array<i64: 64, 64>}, {pipeline_mode = #tpu.pipeline_mode<synchronous>, transform_indices = @transform_4, window_bounds = array<i64: 64, 1>}, {pipeline_mode = #tpu.pipeline_mode<synchronous>, transform_indices = @transform_5, window_bounds = array<i64: 5, 64>}, {pipeline_mode = #tpu.pipeline_mode<synchronous>, transform_indices = @transform_6, window_bounds = array<i64: 5, 1>}, {pipeline_mode = #tpu.pipeline_mode<synchronous>, transform_indices = @transform_7, window_bounds = array<i64: 5, 1>}, {transform_indices = @transform_8, window_bounds = array<i64: 2, 256>}]} {
    %c0 = arith.constant 0 : index
    %c0_0 = arith.constant 0 : index
    %0 = vector.load %arg1[%c0, %c0_0] : memref<20x256xf32, #tpu.memory_space<vmem>>, vector<20x256xf32>
    %1 = vector.extract_strided_slice %0 {offsets = [0, 0], sizes = [16, 256], strides = [1, 1]} : vector<20x256xf32> to vector<16x256xf32>
    %2 = vector.extract_strided_slice %0 {offsets = [16, 0], sizes = [4, 256], strides = [1, 1]} : vector<20x256xf32> to vector<4x256xf32>
    %c0_1 = arith.constant 0 : index
    %c0_2 = arith.constant 0 : index
    %3 = vector.load %arg2[%c0_1, %c0_2] : memref<64x16xf32, #tpu.memory_space<vmem>>, vector<64x16xf32>
    %cst = arith.constant dense<0.000000e+00> : vector<64x256xf32>
    %4 = tpu.matmul %3, %1, %cst {dimension_numbers = #tpu.dot_dimension_numbers<[1], [0], [0], [1], [0, 0, 1, 1], [], []>} : vector<64x16xf32>, vector<16x256xf32>, vector<64x256xf32> -> vector<64x256xf32>
    %c0_3 = arith.constant 0 : index
    %c0_4 = arith.constant 0 : index
    %5 = vector.load %arg3[%c0_3, %c0_4] : memref<64x1xf32, #tpu.memory_space<vmem>>, vector<64x1xf32>
    %6 = vector.broadcast %5 : vector<64x1xf32> to vector<64x256xf32>
    %7 = arith.addf %4, %6 : vector<64x256xf32>
    %cst_5 = arith.constant 0.000000e+00 : f32
    %8 = vector.broadcast %cst_5 : f32 to vector<64x256xf32>
    %9 = arith.maximumf %7, %8 : vector<64x256xf32>
    %c0_6 = arith.constant 0 : index
    %c0_7 = arith.constant 0 : index
    %10 = vector.load %arg4[%c0_6, %c0_7] : memref<64x64xf32, #tpu.memory_space<vmem>>, vector<64x64xf32>
    %cst_8 = arith.constant dense<0.000000e+00> : vector<64x256xf32>
    %11 = tpu.matmul %10, %9, %cst_8 {dimension_numbers = #tpu.dot_dimension_numbers<[1], [0], [0], [1], [0, 0, 1, 1], [], []>} : vector<64x64xf32>, vector<64x256xf32>, vector<64x256xf32> -> vector<64x256xf32>
    %c0_9 = arith.constant 0 : index
    %c0_10 = arith.constant 0 : index
    %12 = vector.load %arg5[%c0_9, %c0_10] : memref<64x1xf32, #tpu.memory_space<vmem>>, vector<64x1xf32>
    %13 = vector.broadcast %12 : vector<64x1xf32> to vector<64x256xf32>
    %14 = arith.addf %11, %13 : vector<64x256xf32>
    %cst_11 = arith.constant 0.000000e+00 : f32
    %15 = vector.broadcast %cst_11 : f32 to vector<64x256xf32>
    %16 = arith.maximumf %14, %15 : vector<64x256xf32>
    %c0_12 = arith.constant 0 : index
    %c0_13 = arith.constant 0 : index
    %17 = vector.load %arg6[%c0_12, %c0_13] : memref<5x64xf32, #tpu.memory_space<vmem>>, vector<5x64xf32>
    %cst_14 = arith.constant dense<0.000000e+00> : vector<5x256xf32>
    %18 = tpu.matmul %17, %16, %cst_14 {dimension_numbers = #tpu.dot_dimension_numbers<[1], [0], [0], [1], [0, 0, 1, 1], [], []>} : vector<5x64xf32>, vector<64x256xf32>, vector<5x256xf32> -> vector<5x256xf32>
    %c0_15 = arith.constant 0 : index
    %c0_16 = arith.constant 0 : index
    %19 = vector.load %arg7[%c0_15, %c0_16] : memref<5x1xf32, #tpu.memory_space<vmem>>, vector<5x1xf32>
    %20 = vector.broadcast %19 : vector<5x1xf32> to vector<5x256xf32>
    %21 = arith.addf %18, %20 : vector<5x256xf32>
    %22 = vector.extract_strided_slice %21 {offsets = [0, 0], sizes = [4, 256], strides = [1, 1]} : vector<5x256xf32> to vector<4x256xf32>
    %23 = math.tanh %22 : vector<4x256xf32>
    %24 = vector.extract_strided_slice %21 {offsets = [4, 0], sizes = [1, 256], strides = [1, 1]} : vector<5x256xf32> to vector<1x256xf32>
    %c0_17 = arith.constant 0 : index
    %c0_18 = arith.constant 0 : index
    %25 = vector.load %arg8[%c0_17, %c0_18] : memref<5x1xf32, #tpu.memory_space<vmem>>, vector<4x1xf32>
    %c4 = arith.constant 4 : index
    %c0_19 = arith.constant 0 : index
    %26 = vector.load %arg8[%c4, %c0_19] : memref<5x1xf32, #tpu.memory_space<vmem>>, vector<1x1xf32>
    %27 = arith.subf %2, %23 : vector<4x256xf32>
    %28 = arith.mulf %27, %27 : vector<4x256xf32>
    %29 = vector.broadcast %25 : vector<4x1xf32> to vector<4x256xf32>
    %30 = arith.mulf %28, %29 : vector<4x256xf32>
    %cst_20 = arith.constant dense<0.000000e+00> : vector<256xf32>
    %31 = vector.multi_reduction <add>, %30, %cst_20 [0] : vector<4x256xf32> to vector<256xf32>
    %32 = vector.shape_cast %31 : vector<256xf32> to vector<1x256xf32>
    %cst_21 = arith.constant 5.000000e-01 : f32
    %33 = vector.broadcast %cst_21 : f32 to vector<1x256xf32>
    %34 = arith.mulf %33, %32 : vector<1x256xf32>
    %35 = vector.broadcast %26 : vector<1x1xf32> to vector<1x256xf32>
    %36 = arith.subf %35, %34 : vector<1x256xf32>
    %37 = tpu.concatenate %36, %24 in 0 : vector<1x256xf32>, vector<1x256xf32> -> vector<2x256xf32>
    %c0_22 = arith.constant 0 : index
    %c0_23 = arith.constant 0 : index
    %38 = vector.load %arg9[%c0_22, %c0_23] : memref<2x256xf32, #tpu.memory_space<vmem>>, vector<2x256xf32>
    tpu.vector_store %arg9[%c0_22, %c0_23], %37 {strides = array<i32>} : memref<2x256xf32, #tpu.memory_space<vmem>>, vector<2x256xf32>,
    return
  }
  func.func @transform_0(%arg0: i32) -> (i32, i32) {
    %c0_i32 = arith.constant 0 : i32
    %c0_i32_0 = arith.constant 0 : i32
    return %c0_i32, %arg0 : i32, i32
  }
  func.func @transform_1(%arg0: i32) -> (i32, i32) {
    %c0_i32 = arith.constant 0 : i32
    %c0_i32_0 = arith.constant 0 : i32
    %c0_i32_1 = arith.constant 0 : i32
    return %c0_i32, %c0_i32_0 : i32, i32
  }
  func.func @transform_2(%arg0: i32) -> (i32, i32) {
    %c0_i32 = arith.constant 0 : i32
    %c0_i32_0 = arith.constant 0 : i32
    %c0_i32_1 = arith.constant 0 : i32
    return %c0_i32, %c0_i32_0 : i32, i32
  }
  func.func @transform_3(%arg0: i32) -> (i32, i32) {
    %c0_i32 = arith.constant 0 : i32
    %c0_i32_0 = arith.constant 0 : i32
    %c0_i32_1 = arith.constant 0 : i32
    return %c0_i32, %c0_i32_0 : i32, i32
  }
  func.func @transform_4(%arg0: i32) -> (i32, i32) {
    %c0_i32 = arith.constant 0 : i32
    %c0_i32_0 = arith.constant 0 : i32
    %c0_i32_1 = arith.constant 0 : i32
    return %c0_i32, %c0_i32_0 : i32, i32
  }
  func.func @transform_5(%arg0: i32) -> (i32, i32) {
    %c0_i32 = arith.constant 0 : i32
    %c0_i32_0 = arith.constant 0 : i32
    %c0_i32_1 = arith.constant 0 : i32
    return %c0_i32, %c0_i32_0 : i32, i32
  }
  func.func @transform_6(%arg0: i32) -> (i32, i32) {
    %c0_i32 = arith.constant 0 : i32
    %c0_i32_0 = arith.constant 0 : i32
    %c0_i32_1 = arith.constant 0 : i32
    return %c0_i32, %c0_i32_0 : i32, i32
  }
  func.func @transform_7(%arg0: i32) -> (i32, i32) {
    %c0_i32 = arith.constant 0 : i32
    %c0_i32_0 = arith.constant 0 : i32
    %c0_i32_1 = arith.constant 0 : i32
    return %c0_i32, %c0_i32_0 : i32, i32
  }
  func.func @transform_8(%arg0: i32) -> (i32, i32) {
    %c0_i32 = arith.constant 0 : i32
    %c0_i32_0 = arith.constant 0 : i32
    return %c0_i32, %arg0 : i32, i32
  }
}

</mosaic_0001>

<llo_original>
// kernel: tpu_custom_call.1
$region0: #{tpu_custom_call.1}
  #allocation0 [shape = 'u32[]', space=smem, size = 0x4, offset = 0x4, fixed_abs, tag = 'smem constant byte address 0x4 - core index']
  #allocation1 [shape = 'u32[144,128]{1,0:T(1,128)}', space=vmem, size = 0x12000, scoped, tag = 'internal scratch']
  %s0 = inlined_call_operand.vmem [shape: f32[20,512], index: 0, kind: input, shape index: {}]
  %s1 = inlined_call_operand.vmem [shape: f32[64,16], index: 1, kind: input, shape index: {}]
  %s2 = inlined_call_operand.vmem [shape: f32[64,1], index: 2, kind: input, shape index: {}]
  %s3 = inlined_call_operand.vmem [shape: f32[64,64], index: 3, kind: input, shape index: {}]
  %s4 = inlined_call_operand.vmem [shape: f32[64,1], index: 4, kind: input, shape index: {}]
  %s5 = inlined_call_operand.vmem [shape: f32[5,64], index: 5, kind: input, shape index: {}]
  %s6 = inlined_call_operand.vmem [shape: f32[5,1], index: 6, kind: input, shape index: {}]
  %s7 = inlined_call_operand.vmem [shape: f32[5,1], index: 7, kind: input, shape index: {}]
  %s8 = inlined_call_operand.hbm [shape: f32[2,512], index: 8, kind: output, shape index: {}]
  %s9 = sld [smem:[#allocation0]]
  $region88: #{tpu_custom_call.1} parent=0
    _
  %s11 = ssub.s32 1, %s9
  %s12 = scalar_select 0, %s11, %s9
  $region1: #{tpu_custom_call.1} parent=0
    #allocation2 [shape = 'u8[49152]{0}', space=vmem, size = 0xc000, scoped, tag = 'input window, operand 0']
    #allocation3 [shape = 'u8[4096]{0}', space=vmem, size = 0x1000, scoped, tag = 'output window, operand 0']
    #allocation4 [shape = 's32[2]{0}', space=sflag, size = 0x8, scoped, tag = 'scoped memory for tpu_custom_call.1']
    %13 = vsyncpa [#allocation4], 0
    %s14 = scalar_lea.sflag [#allocation4], 1
    %15 = vsyncpa %s14, 0
    loop: start=0, step=1, limit=4
    $region2: #{tpu_custom_call.1} parent=1 // loop_pre_header
      _
    $region3: #{tpu_custom_call.1} parent=1 // loop_header
      %s17 = sphi 0, %s21
      %p18 = scmp.ge.s32.totalorder %s17, 4
      %s27 = sphi 0, %s29
      %s30 = sphi 0, %s27
      %s31 = sphi 0, %s30
      %s47 = sphi 0, %s31
      %s51 = sphi 0, %s51
      %s53 = sphi 0, %s51
      %s54 = sphi 0, %s53
      %s68 = sphi 0, %s54
      %s72 = sphi 0, %s72
      %s74 = sphi 0, %s72
      %s75 = sphi 0, %s74
      %s89 = sphi 0, %s75
      %s93 = sphi 0, %s93
      %s95 = sphi 0, %s93
      %s96 = sphi 0, %s95
      %s110 = sphi 0, %s96
      %s114 = sphi 0, %s114
      %s116 = sphi 0, %s114
      %s117 = sphi 0, %s116
      %s131 = sphi 0, %s117
      %s135 = sphi 0, %s135
      %s137 = sphi 0, %s135
      %s138 = sphi 0, %s137
      %s152 = sphi 0, %s138
      %s156 = sphi 0, %s156
      %s158 = sphi 0, %s156
      %s159 = sphi 0, %s158
      %s173 = sphi 0, %s159
      %s177 = sphi 0, %s177
      %s179 = sphi 0, %s177
      %s180 = sphi 0, %s179
      %s194 = sphi 0, %s180
      %s200 = sphi 0, %s202
      %s203 = sphi 0, %s200
      %s204 = sphi 0, %s203
      %s220 = sphi 0, %s204
    $region4: #{tpu_custom_call.1} parent=1 // loop_header_branch
      %20 = sbr.rel (%p18) target = $region8
    $region5: #{tpu_custom_call.1} parent=1 // loop_body
      %s22 = ssub.s32 %s17, 1
      %s23 = ssub.s32 %s17, 2
      %s24 = sadd.s32 %s17, 1
      %s25 = ssub.s32 %s17, %s24
      %p26 = scmp.eq.s32.totalorder %s25, 0
      %s28 = sadd.s32 %s27, 1
      %s29 = scalar_select %p26, %s27, %s28
      %p32 = pneg %p26
      %p33 = scmp.eq.s32.totalorder %s17, 1
      %p34 = por %p32, %p33
      %p35 = scmp.ne.s32.totalorder %s27, %s30
      %p36 = scmp.eq.s32.totalorder %s17, 0
      %p37 = por %p35, %p36
      %p38 = scmp.ne.s32.totalorder %s27, %s30
      %p39 = scmp.eq.s32.totalorder %s22, 1
      %p40 = por %p38, %p39
      %p41 = scmp.ne.s32.totalorder %s30, %s31
      %p42 = scmp.eq.s32.totalorder %s22, 0
      %p43 = por %p41, %p42
      %p44 = scmp.ne.s32.totalorder %s30, %s31
      %p45 = scmp.eq.s32.totalorder %s23, 1
      %p46 = por %p44, %p45
      %p48 = scmp.ne.s32.totalorder %s31, %s47
      %p49 = scmp.eq.s32.totalorder %s23, 0
      %p50 = por %p48, %p49
      %s52 = sadd.s32 %s51, 1
      %p55 = scmp.eq.s32.totalorder %s17, 1
      %p56 = scmp.ne.s32.totalorder %s51, %s53
      %p57 = scmp.eq.s32.totalorder %s17, 0
      %p58 = por %p56, %p57
      %p59 = scmp.ne.s32.totalorder %s51, %s53
      %p60 = scmp.eq.s32.totalorder %s22, 1
      %p61 = por %p59, %p60
      %p62 = scmp.ne.s32.totalorder %s53, %s54
      %p63 = scmp.eq.s32.totalorder %s22, 0
      %p64 = por %p62, %p63
      %p65 = scmp.ne.s32.totalorder %s53, %s54
      %p66 = scmp.eq.s32.totalorder %s23, 1
      %p67 = por %p65, %p66
      %p69 = scmp.ne.s32.totalorder %s54, %s68
      %p70 = scmp.eq.s32.totalorder %s23, 0
      %p71 = por %p69, %p70
      %s73 = sadd.s32 %s72, 1
      %p76 = scmp.eq.s32.totalorder %s17, 1
      %p77 = scmp.ne.s32.totalorder %s72, %s74
      %p78 = scmp.eq.s32.totalorder %s17, 0
      %p79 = por %p77, %p78
      %p80 = scmp.ne.s32.totalorder %s72, %s74
      %p81 = scmp.eq.s32.totalorder %s22, 1
      %p82 = por %p80, %p81
      %p83 = scmp.ne.s32.totalorder %s74, %s75
      %p84 = scmp.eq.s32.totalorder %s22, 0
      %p85 = por %p83, %p84
      %p86 = scmp.ne.s32.totalorder %s74, %s75
      %p87 = scmp.eq.s32.totalorder %s23, 1
      %p88 = por %p86, %p87
      %p90 = scmp.ne.s32.totalorder %s75, %s89
      %p91 = scmp.eq.s32.totalorder %s23, 0
      %p92 = por %p90, %p91
      %s94 = sadd.s32 %s93, 1
      %p97 = scmp.eq.s32.totalorder %s17, 1
      %p98 = scmp.ne.s32.totalorder %s93, %s95
      %p99 = scmp.eq.s32.totalorder %s17, 0
      %p100 = por %p98, %p99
      %p101 = scmp.ne.s32.totalorder %s93, %s95
      %p102 = scmp.eq.s32.totalorder %s22, 1
      %p103 = por %p101, %p102
      %p104 = scmp.ne.s32.totalorder %s95, %s96
      %p105 = scmp.eq.s32.totalorder %s22, 0
      %p106 = por %p104, %p105
      %p107 = scmp.ne.s32.totalorder %s95, %s96
      %p108 = scmp.eq.s32.totalorder %s23, 1
      %p109 = por %p107, %p108
      %p111 = scmp.ne.s32.totalorder %s96, %s110
      %p112 = scmp.eq.s32.totalorder %s23, 0
      %p113 = por %p111, %p112
      %s115 = sadd.s32 %s114, 1
      %p118 = scmp.eq.s32.totalorder %s17, 1
      %p119 = scmp.ne.s32.totalorder %s114, %s116
      %p120 = scmp.eq.s32.totalorder %s17, 0
      %p121 = por %p119, %p120
      %p122 = scmp.ne.s32.totalorder %s114, %s116
      %p123 = scmp.eq.s32.totalorder %s22, 1
      %p124 = por %p122, %p123
      %p125 = scmp.ne.s32.totalorder %s116, %s117
      %p126 = scmp.eq.s32.totalorder %s22, 0
      %p127 = por %p125, %p126
      %p128 = scmp.ne.s32.totalorder %s116, %s117
      %p129 = scmp.eq.s32.totalorder %s23, 1
      %p130 = por %p128, %p129
      %p132 = scmp.ne.s32.totalorder %s117, %s131
      %p133 = scmp.eq.s32.totalorder %s23, 0
      %p134 = por %p132, %p133
      %s136 = sadd.s32 %s135, 1
      %p139 = scmp.eq.s32.totalorder %s17, 1
      %p140 = scmp.ne.s32.totalorder %s135, %s137
      %p141 = scmp.eq.s32.totalorder %s17, 0
      %p142 = por %p140, %p141
      %p143 = scmp.ne.s32.totalorder %s135, %s137
      %p144 = scmp.eq.s32.totalorder %s22, 1
      %p145 = por %p143, %p144
      %p146 = scmp.ne.s32.totalorder %s137, %s138
      %p147 = scmp.eq.s32.totalorder %s22, 0
      %p148 = por %p146, %p147
      %p149 = scmp.ne.s32.totalorder %s137, %s138
      %p150 = scmp.eq.s32.totalorder %s23, 1
      %p151 = por %p149, %p150
      %p153 = scmp.ne.s32.totalorder %s138, %s152
      %p154 = scmp.eq.s32.totalorder %s23, 0
      %p155 = por %p153, %p154
      %s157 = sadd.s32 %s156, 1
      %p160 = scmp.eq.s32.totalorder %s17, 1
      %p161 = scmp.ne.s32.totalorder %s156, %s158
      %p162 = scmp.eq.s32.totalorder %s17, 0
      %p163 = por %p161, %p162
      %p164 = scmp.ne.s32.totalorder %s156, %s158
      %p165 = scmp.eq.s32.totalorder %s22, 1
      %p166 = por %p164, %p165
      %p167 = scmp.ne.s32.totalorder %s158, %s159
      %p168 = scmp.eq.s32.totalorder %s22, 0
      %p169 = por %p167, %p168
      %p170 = scmp.ne.s32.totalorder %s158, %s159
      %p171 = scmp.eq.s32.totalorder %s23, 1
      %p172 = por %p170, %p171
      %p174 = scmp.ne.s32.totalorder %s159, %s173
      %p175 = scmp.eq.s32.totalorder %s23, 0
      %p176 = por %p174, %p175
      %s178 = sadd.s32 %s177, 1
      %p181 = scmp.eq.s32.totalorder %s17, 1
      %p182 = scmp.ne.s32.totalorder %s177, %s179
      %p183 = scmp.eq.s32.totalorder %s17, 0
      %p184 = por %p182, %p183
      %p185 = scmp.ne.s32.totalorder %s177, %s179
      %p186 = scmp.eq.s32.totalorder %s22, 1
      %p187 = por %p185, %p186
      %p188 = scmp.ne.s32.totalorder %s179, %s180
      %p189 = scmp.eq.s32.totalorder %s22, 0
      %p190 = por %p188, %p189
      %p191 = scmp.ne.s32.totalorder %s179, %s180
      %p192 = scmp.eq.s32.totalorder %s23, 1
      %p193 = por %p191, %p192
      %p195 = scmp.ne.s32.totalorder %s180, %s194
      %p196 = scmp.eq.s32.totalorder %s23, 0
      %p197 = por %p195, %p196
      %s198 = ssub.s32 %s17, %s24
      %p199 = scmp.eq.s32.totalorder %s198, 0
      %s201 = sadd.s32 %s200, 1
      %s202 = scalar_select %p199, %s200, %s201
      %p205 = pneg %p199
      %p206 = scmp.eq.s32.totalorder %s17, 1
      %p207 = por %p205, %p206
      %p208 = scmp.ne.s32.totalorder %s200, %s203
      %p209 = scmp.eq.s32.totalorder %s17, 0
      %p210 = por %p208, %p209
      %p211 = scmp.ne.s32.totalorder %s200, %s203
      %p212 = scmp.eq.s32.totalorder %s22, 1
      %p213 = por %p211, %p212
      %p214 = scmp.ne.s32.totalorder %s203, %s204
      %p215 = scmp.eq.s32.totalorder %s22, 0
      %p216 = por %p214, %p215
      %p217 = scmp.ne.s32.totalorder %s203, %s204
      %p218 = scmp.eq.s32.totalorder %s23, 1
      %p219 = por %p217, %p218
      %p221 = scmp.ne.s32.totalorder %s204, %s220
      %p222 = scmp.eq.s32.totalorder %s23, 0
      %p223 = por %p221, %p222
      %p224 = scmp.le.s32.totalorder 1, %s17
      %p225 = scmp.lt.s32.totalorder %s17, 3
      %p226 = pnand %p224, %p225
      %p227 = pneg %p226
      // Predicated region
      $region9: #{tpu_custom_call.1} parent=5 // pred_check
        _
      $region10: #{tpu_custom_call.1} parent=5 // pred_check_branch
        %229 = sbr.rel (%p226) target = $region12
      $region11: #{tpu_custom_call.1} parent=5 // pred_region
        %s230 = ssub.s32 %s17, 1
        // Predicated region
        $region13: #{tpu_custom_call.1} parent=11 // pred_check
          %p231 = pneg %p64
        $region14: #{tpu_custom_call.1} parent=11 // pred_check_branch
          %233 = sbr.rel (%p231) target = $region16
        $region15: #{tpu_custom_call.1} parent=11 // pred_region
          _
        $region16: #{tpu_custom_call.1} parent=11 // pred_fallthru
          _
        // Predicated region
        $region17: #{tpu_custom_call.1} parent=11 // pred_check
          %p234 = pneg %p85
        $region18: #{tpu_custom_call.1} parent=11 // pred_check_branch
          %236 = sbr.rel (%p234) target = $region20
        $region19: #{tpu_custom_call.1} parent=11 // pred_region
          _
        $region20: #{tpu_custom_call.1} parent=11 // pred_fallthru
          _
        // Predicated region
        $region21: #{tpu_custom_call.1} parent=11 // pred_check
          %p237 = pneg %p106
        $region22: #{tpu_custom_call.1} parent=11 // pred_check_branch
          %239 = sbr.rel (%p237) target = $region24
        $region23: #{tpu_custom_call.1} parent=11 // pred_region
          _
        $region24: #{tpu_custom_call.1} parent=11 // pred_fallthru
          _
        // Predicated region
        $region25: #{tpu_custom_call.1} parent=11 // pred_check
          %p240 = pneg %p127
        $region26: #{tpu_custom_call.1} parent=11 // pred_check_branch
          %242 = sbr.rel (%p240) target = $region28
        $region27: #{tpu_custom_call.1} parent=11 // pred_region
          _
        $region28: #{tpu_custom_call.1} parent=11 // pred_fallthru
          _
        // Predicated region
        $region29: #{tpu_custom_call.1} parent=11 // pred_check
          %p243 = pneg %p148
        $region30: #{tpu_custom_call.1} parent=11 // pred_check_branch
          %245 = sbr.rel (%p243) target = $region32
        $region31: #{tpu_custom_call.1} parent=11 // pred_region
          _
        $region32: #{tpu_custom_call.1} parent=11 // pred_fallthru
          _
        // Predicated region
        $region33: #{tpu_custom_call.1} parent=11 // pred_check
          %p246 = pneg %p169
        $region34: #{tpu_custom_call.1} parent=11 // pred_check_branch
          %248 = sbr.rel (%p246) target = $region36
        $region35: #{tpu_custom_call.1} parent=11 // pred_region
          _
        $region36: #{tpu_custom_call.1} parent=11 // pred_fallthru
          _
        // Predicated region
        $region37: #{tpu_custom_call.1} parent=11 // pred_check
          %p249 = pneg %p190
        $region38: #{tpu_custom_call.1} parent=11 // pred_check_branch
          %251 = sbr.rel (%p249) target = $region40
        $region39: #{tpu_custom_call.1} parent=11 // pred_region
          _
        $region40: #{tpu_custom_call.1} parent=11 // pred_fallthru
          _
      $region12: #{tpu_custom_call.1} parent=5 // pred_fallthru
        _
      %p252 = scmp.lt.s32.totalorder %s17, 2
      // Predicated region
      $region41: #{tpu_custom_call.1} parent=5 // pred_check
        %p253 = pneg %p252
      $region42: #{tpu_custom_call.1} parent=5 // pred_check_branch
        %255 = sbr.rel (%p253) target = $region44
      $region43: #{tpu_custom_call.1} parent=5 // pred_region
        // Predicated region
        $region45: #{tpu_custom_call.1} parent=43 // pred_check
          %p256 = pneg %p37
        $region46: #{tpu_custom_call.1} parent=43 // pred_check_branch
          %258 = sbr.rel (%p256) target = $region48
        $region47: #{tpu_custom_call.1} parent=43 // pred_region
          %s259 = sand.u32 %s27, 1
          %s260 = sand.u32 %s27, 1
          %s261 = smul.addr %s260, 48
          %s262 = scalar_lea.vmem [#allocation2], %s261
          %s263 = smul.u32 2, %s17
          %s264 = smul.addr %s263, 8
          %s265 = scalar_lea.vmem %s0, %s264
          // Predicated region
          $region49: #{tpu_custom_call.1} parent=47 // pred_check
            _
          $region50: #{tpu_custom_call.1} parent=47 // pred_check_branch
            %267 = sbr.rel (0) target = $region52
          $region51: #{tpu_custom_call.1} parent=47 // pred_region
            // Predicated region
            $region53: #{tpu_custom_call.1} parent=51 // pred_check
              _
            $region54: #{tpu_custom_call.1} parent=51 // pred_check_branch
              %269 = sbr.rel (0) target = $region56
            $region55: #{tpu_custom_call.1} parent=51 // pred_region
              loop: start=0, step=1, limit=1
              $region57: #{tpu_custom_call.1} parent=55 // loop_pre_header
                _
              $region58: #{tpu_custom_call.1} parent=55 // loop_header
                %s271 = sphi 0, %s275
                %p272 = scmp.ge.s32.totalorder %s271, 1
                %s276 = sphi %s265, %s265
                %s277 = sphi %s262, %s262
              $region59: #{tpu_custom_call.1} parent=55 // loop_header_branch
                %274 = sbr.rel (%p272) target = $region63
              $region60: #{tpu_custom_call.1} parent=55 // loop_body
                %v278 = vld [vmem:[%s276] sm:$0xff]
                %279 = vst [vmem:[%s277] sm:$0xff] %v278
                %v280 = vld [vmem:[%s276 + $0x8] sm:$0xff]
                %281 = vst [vmem:[%s277 + $0x8] sm:$0xff] %v280
                %v282 = vld [vmem:[%s276 + $0x20] sm:$0xff]
                %283 = vst [vmem:[%s277 + $0x10] sm:$0xff] %v282
                %v284 = vld [vmem:[%s276 + $0x28] sm:$0xff]
                %285 = vst [vmem:[%s277 + $0x18] sm:$0xff] %v284
                %v286 = vld [vmem:[%s276 + $0x40] sm:$0xff]
                %287 = vst [vmem:[%s277 + $0x20] sm:$0xff] %v286
                %v288 = vld [vmem:[%s276 + $0x48] sm:$0xff]
                %289 = vst [vmem:[%s277 + $0x28] sm:$0xff] %v288
              $region61: #{tpu_custom_call.1} parent=55 // loop_footer
                %s275 = sadd.s32 1, %s271
              $region62: #{tpu_custom_call.1} parent=55 // loop_footer_branch
                %270 = sbr.rel target = $region58
              $region63: #{tpu_custom_call.1} parent=55 // loop_exit
                _
            $region56: #{tpu_custom_call.1} parent=51 // pred_fallthru
              _
            // Predicated region
            $region64: #{tpu_custom_call.1} parent=51 // pred_check
              _
            $region65: #{tpu_custom_call.1} parent=51 // pred_check_branch
              %291 = sbr.rel target = $region67
            $region66: #{tpu_custom_call.1} parent=51 // pred_region
              _
            $region67: #{tpu_custom_call.1} parent=51 // pred_fallthru
              _
          $region52: #{tpu_custom_call.1} parent=47 // pred_fallthru
            _
          %292 = vnop
        $region48: #{tpu_custom_call.1} parent=43 // pred_fallthru
          _
      $region44: #{tpu_custom_call.1} parent=5 // pred_fallthru
        _
      %p293 = scmp.le.s32.totalorder 1, %s17
      %p294 = scmp.lt.s32.totalorder %s17, 3
      %p295 = pnand %p293, %p294
      %p296 = pneg %p295
      // Predicated region
      $region68: #{tpu_custom_call.1} parent=5 // pred_check
        _
      $region69: #{tpu_custom_call.1} parent=5 // pred_check_branch
        %298 = sbr.rel (%p295) target = $region71
      $region70: #{tpu_custom_call.1} parent=5 // pred_region
        %s299 = ssub.s32 %s17, 1
        %s300 = sand.u32 %s30, 1
        %s301 = sand.u32 %s30, 1
        %s302 = smul.addr %s301, 48
        %s303 = scalar_lea.vmem [#allocation2], %s302
        // Predicated region
        $region72: #{tpu_custom_call.1} parent=70 // pred_check
          %p304 = pneg %p43
        $region73: #{tpu_custom_call.1} parent=70 // pred_check_branch
          %306 = sbr.rel (%p304) target = $region75
        $region74: #{tpu_custom_call.1} parent=70 // pred_region
          _
        $region75: #{tpu_custom_call.1} parent=70 // pred_fallthru
          _
        %s307 = sand.u32 %s30, 1
        %s308 = sand.u32 %s30, 1
        %s309 = smul.addr %s308, 48
        %s310 = scalar_lea.vmem [#allocation2], %s309
        %p311 = pneg %p43
        %p312 = pneg %p40
        %p313 = pneg %p64
        %p314 = pneg %p61
        %p315 = pneg %p85
        %p316 = pneg %p82
        %p317 = pneg %p106
        %p318 = pneg %p103
        %p319 = pneg %p127
        %p320 = pneg %p124
        %p321 = pneg %p148
        %p322 = pneg %p145
        %p323 = pneg %p169
        %p324 = pneg %p166
        %p325 = pneg %p190
        %p326 = pneg %p187
        %p327 = pneg %p216
        %p328 = pneg %p213
        %s329 = sand.u32 %s203, 1
        %s330 = scalar_lea.sflag [#allocation4], %s329
        %s331 = sand.u32 %s203, 1
        %s332 = smul.addr %s331, 4
        %s333 = scalar_lea.vmem [#allocation3], %s332
        %s334 = smul.u32 2, %s22
        %s335 = smul.u32 2, %s22
        %v336 = vld [vmem:[%s303] sm:$0xff]
        %v337 = vld [vmem:[%s303 + $0x8] sm:$0xff]
        %v338 = vld [vmem:[%s303 + $0x10] sm:$0xff]
        %v339 = vld [vmem:[%s303 + $0x18] sm:$0xff]
        %v340 = vld [vmem:[%s303 + $0x20] sm:$0xf]
        %v341 = vld [vmem:[%s303 + $0x28] sm:$0xf]
        %v342 = vld [vmem:[%s1] sm:$0xff]
        %v343 = vld [vmem:[%s1 + $0x8] sm:$0xff]
        %v344 = vld [vmem:[%s1 + $0x10] sm:$0xff]
        %v345 = vld [vmem:[%s1 + $0x18] sm:$0xff]
        %v346 = vld [vmem:[%s1 + $0x20] sm:$0xff]
        %v347 = vld [vmem:[%s1 + $0x28] sm:$0xff]
        %v348 = vld [vmem:[%s1 + $0x30] sm:$0xff]
        %v349 = vld [vmem:[%s1 + $0x38] sm:$0xff]
        %v350 = vld [vmem:[%s2] sm:$0xff]
        %v351 = vld [vmem:[%s2 + $0x8] sm:$0xff]
        %v352 = vld [vmem:[%s2 + $0x10] sm:$0xff]
        %v353 = vld [vmem:[%s2 + $0x18] sm:$0xff]
        %v354 = vld [vmem:[%s2 + $0x20] sm:$0xff]
        %v355 = vld [vmem:[%s2 + $0x28] sm:$0xff]
        %v356 = vld [vmem:[%s2 + $0x30] sm:$0xff]
        %v357 = vld [vmem:[%s2 + $0x38] sm:$0xff]
        %359 = vset.pattern.permute.xlu0 0
        %360 = vperm.xlu0 %359, %v350
        %v361 = vpop.permute.xlu0 %360
        %364 = vset.pattern.permute.xlu0 0
        %365 = vperm.xlu0 %364, %v351
        %v366 = vpop.permute.xlu0 %365
        %369 = vset.pattern.permute.xlu0 0
        %370 = vperm.xlu0 %369, %v352
        %v371 = vpop.permute.xlu0 %370
        %374 = vset.pattern.permute.xlu0 0
        %375 = vperm.xlu0 %374, %v353
        %v376 = vpop.permute.xlu0 %375
        %379 = vset.pattern.permute.xlu0 0
        %380 = vperm.xlu0 %379, %v354
        %v381 = vpop.permute.xlu0 %380
        %384 = vset.pattern.permute.xlu0 0
        %385 = vperm.xlu0 %384, %v355
        %v386 = vpop.permute.xlu0 %385
        %389 = vset.pattern.permute.xlu0 0
        %390 = vperm.xlu0 %389, %v356
        %v391 = vpop.permute.xlu0 %390
        %394 = vset.pattern.permute.xlu0 0
        %395 = vperm.xlu0 %394, %v357
        %v396 = vpop.permute.xlu0 %395
        %vm398 = vcmask 130048
        %v400 = vsel %vm398, %v342, 0
        %v403 = vsel %vm398, %v343, 0
        %v406 = vsel %vm398, %v344, 0
        %v409 = vsel %vm398, %v345, 0
        %v412 = vsel %vm398, %v346, 0
        %v415 = vsel %vm398, %v347, 0
        %v418 = vsel %vm398, %v348, 0
        %v421 = vsel %vm398, %v349, 0
        %423 = vmatprep.subr.mxu0 0.0
        %424 = vmatpush1.msra.mxu0 0.0
        %425 = vmatprep.subr.mxu0 0.0
        %426 = vmatpush1.msra.mxu0 0.0
        %427 = vmatprep.subr.mxu0 0.0
        %428 = vmatpush1.msra.mxu0 0.0
        %429 = vmatprep.subr.mxu0 0.0
        %430 = vmatpush1.msra.mxu0 0.0
        %431 = vmatprep.subr.mxu0 0.0
        %432 = vmatpush1.msra.mxu0 0.0
        %433 = vmatprep.subr.mxu0 0.0
        %434 = vmatpush1.msra.mxu0 0.0
        %435 = vmatprep.subr.mxu0 0.0
        %436 = vmatpush1.msra.mxu0 0.0
        %437 = vmatprep.subr.mxu0 0.0
        %438 = vmatpush1.msra.mxu0 0.0
        %439 = vmatprep.subr.mxu0 0.0
        %440 = vmatpush1.msra.mxu0 0.0
        %441 = vmatprep.subr.mxu0 0.0
        %442 = vmatpush1.msra.mxu0 0.0
        %443 = vmatprep.subr.mxu0 0.0
        %444 = vmatpush1.msra.mxu0 0.0
        %445 = vmatprep.subr.mxu0 0.0
        %446 = vmatpush1.msra.mxu0 0.0
        %447 = vmatprep.subr.mxu0 0.0
        %448 = vmatpush1.msra.mxu0 0.0
        %449 = vmatprep.subr.mxu0 0.0
        %450 = vmatpush1.msra.mxu0 0.0
        %451 = vmatprep.subr.mxu0 %v339
        %452 = vmatpush1.msra.mxu0 %v338
        %453 = vmatprep.subr.mxu0 %v337
        %454 = vmatpush1.msra.mxu0 %v336
        %455 = vmatprep.subr.mxu0 0.0
        %456 = vmatpush2.msra.mxu0 0.0
        %457 = vmatprep.subr.mxu0 0.0
        %458 = vmatpush2.msra.mxu0 0.0
        %459 = vmatprep.subr.mxu0 0.0
        %460 = vmatpush2.msra.mxu0 0.0
        %461 = vmatprep.subr.mxu0 0.0
        %462 = vmatpush2.msra.mxu0 0.0
        %463 = vmatprep.subr.mxu0 0.0
        %464 = vmatpush2.msra.mxu0 0.0
        %465 = vmatprep.subr.mxu0 0.0
        %466 = vmatpush2.msra.mxu0 0.0
        %467 = vmatprep.subr.mxu0 0.0
        %468 = vmatpush2.msra.mxu0 0.0
        %469 = vmatprep.subr.mxu0 0.0
        %470 = vmatpush2.msra.mxu0 0.0
        %471 = vmatprep.subr.mxu0 0.0
        %472 = vmatpush2.msra.mxu0 0.0
        %473 = vmatprep.subr.mxu0 0.0
        %474 = vmatpush2.msra.mxu0 0.0
        %475 = vmatprep.subr.mxu0 0.0
        %476 = vmatpush2.msra.mxu0 0.0
        %477 = vmatprep.subr.mxu0 0.0
        %478 = vmatpush2.msra.mxu0 0.0
        %479 = vmatprep.subr.mxu0 0.0
        %480 = vmatpush2.msra.mxu0 0.0
        %481 = vmatprep.subr.mxu0 0.0
        %482 = vmatpush2.msra.mxu0 0.0
        %483 = vmatprep.subr.mxu0 0.0
        %484 = vmatpush2.msra.mxu0 0.0
        %485 = vmatprep.subr.mxu0 0.0
        %486 = vmatpush2.msra.mxu0 0.0
        %487 = vmatprep.mubr.f32.mxu0 0.0
        %488 = vmatmul.mubr.f32.gmra.mxu0 %v400
        %v489 = vpop.f32.mrf.mxu0
        %v490 = vadd.f32 %v361, %v489
        %v491 = vpop.f32.mrf.mxu0
        %v492 = vadd.f32 %v361, %v491
        %493 = vmatprep.mubr.f32.mxu0 0.0
        %494 = vmatmul.mubr.f32.gmra.mxu0 %v403
        %v495 = vpop.f32.mrf.mxu0
        %v496 = vadd.f32 %v366, %v495
        %v497 = vpop.f32.mrf.mxu0
        %v498 = vadd.f32 %v366, %v497
        %499 = vmatprep.mubr.f32.mxu0 0.0
        %500 = vmatmul.mubr.f32.gmra.mxu0 %v406
        %v501 = vpop.f32.mrf.mxu0
        %v502 = vadd.f32 %v371, %v501
        %v503 = vpop.f32.mrf.mxu0
        %v504 = vadd.f32 %v371, %v503
        %505 = vmatprep.mubr.f32.mxu0 0.0
        %506 = vmatmul.mubr.f32.gmra.mxu0 %v409
        %v507 = vpop.f32.mrf.mxu0
        %v508 = vadd.f32 %v376, %v507
        %v509 = vpop.f32.mrf.mxu0
        %v510 = vadd.f32 %v376, %v509
        %511 = vmatprep.mubr.f32.mxu0 0.0
        %512 = vmatmul.mubr.f32.gmra.mxu0 %v412
        %v513 = vpop.f32.mrf.mxu0
        %v514 = vadd.f32 %v381, %v513
        %v515 = vpop.f32.mrf.mxu0
        %v516 = vadd.f32 %v381, %v515
        %517 = vmatprep.mubr.f32.mxu0 0.0
        %518 = vmatmul.mubr.f32.gmra.mxu0 %v415
        %v519 = vpop.f32.mrf.mxu0
        %v520 = vadd.f32 %v386, %v519
        %v521 = vpop.f32.mrf.mxu0
        %v522 = vadd.f32 %v386, %v521
        %523 = vmatprep.mubr.f32.mxu0 0.0
        %524 = vmatmul.mubr.f32.gmra.mxu0 %v418
        %v525 = vpop.f32.mrf.mxu0
        %v526 = vadd.f32 %v391, %v525
        %v527 = vpop.f32.mrf.mxu0
        %v528 = vadd.f32 %v391, %v527
        %529 = vmatprep.mubr.f32.mxu0 0.0
        %530 = vmatmul.mubr.f32.gmra.mxu0 %v421
        %v531 = vpop.f32.mrf.mxu0
        %v532 = vadd.f32 %v396, %v531
        %v533 = vpop.f32.mrf.mxu0
        %v534 = vadd.f32 %v396, %v533
        %535 = vdwg.mxu0
        %v536 = vmax.f32 %v490, 0.0
        %v537 = vmax.f32 %v492, 0.0
        %v538 = vmax.f32 %v496, 0.0
        %v539 = vmax.f32 %v498, 0.0
        %v540 = vmax.f32 %v502, 0.0
        %v541 = vmax.f32 %v504, 0.0
        %v542 = vmax.f32 %v508, 0.0
        %v543 = vmax.f32 %v510, 0.0
        %v544 = vmax.f32 %v514, 0.0
        %v545 = vmax.f32 %v516, 0.0
        %v546 = vmax.f32 %v520, 0.0
        %v547 = vmax.f32 %v522, 0.0
        %v548 = vmax.f32 %v526, 0.0
        %v549 = vmax.f32 %v528, 0.0
        %v550 = vmax.f32 %v532, 0.0
        %v551 = vmax.f32 %v534, 0.0
        %v552 = vld [vmem:[%s3] sm:$0xff]
        %v553 = vld [vmem:[%s3 + $0x8] sm:$0xff]
        %v554 = vld [vmem:[%s3 + $0x10] sm:$0xff]
        %v555 = vld [vmem:[%s3 + $0x18] sm:$0xff]
        %v556 = vld [vmem:[%s3 + $0x20] sm:$0xff]
        %v557 = vld [vmem:[%s3 + $0x28] sm:$0xff]
        %v558 = vld [vmem:[%s3 + $0x30] sm:$0xff]
        %v559 = vld [vmem:[%s3 + $0x38] sm:$0xff]
        %v560 = vld [vmem:[%s4] sm:$0xff]
        %v561 = vld [vmem:[%s4 + $0x8] sm:$0xff]
        %v562 = vld [vmem:[%s4 + $0x10] sm:$0xff]
        %v563 = vld [vmem:[%s4 + $0x18] sm:$0xff]
        %v564 = vld [vmem:[%s4 + $0x20] sm:$0xff]
        %v565 = vld [vmem:[%s4 + $0x28] sm:$0xff]
        %v566 = vld [vmem:[%s4 + $0x30] sm:$0xff]
        %v567 = vld [vmem:[%s4 + $0x38] sm:$0xff]
        %569 = vset.pattern.permute.xlu0 0
        %570 = vperm.xlu0 %569, %v560
        %v571 = vpop.permute.xlu0 %570
        %574 = vset.pattern.permute.xlu0 0
        %575 = vperm.xlu0 %574, %v561
        %v576 = vpop.permute.xlu0 %575
        %579 = vset.pattern.permute.xlu0 0
        %580 = vperm.xlu0 %579, %v562
        %v581 = vpop.permute.xlu0 %580
        %584 = vset.pattern.permute.xlu0 0
        %585 = vperm.xlu0 %584, %v563
        %v586 = vpop.permute.xlu0 %585
        %589 = vset.pattern.permute.xlu0 0
        %590 = vperm.xlu0 %589, %v564
        %v591 = vpop.permute.xlu0 %590
        %594 = vset.pattern.permute.xlu0 0
        %595 = vperm.xlu0 %594, %v565
        %v596 = vpop.permute.xlu0 %595
        %599 = vset.pattern.permute.xlu0 0
        %600 = vperm.xlu0 %599, %v566
        %v601 = vpop.permute.xlu0 %600
        %604 = vset.pattern.permute.xlu0 0
        %605 = vperm.xlu0 %604, %v567
        %v606 = vpop.permute.xlu0 %605
        %vm608 = vcmask 523264
        %v610 = vsel %vm608, %v552, 0
        %v613 = vsel %vm608, %v553, 0
        %v616 = vsel %vm608, %v554, 0
        %v619 = vsel %vm608, %v555, 0
        %v622 = vsel %vm608, %v556, 0
        %v625 = vsel %vm608, %v557, 0
        %v628 = vsel %vm608, %v558, 0
        %v631 = vsel %vm608, %v559, 0
        %633 = vmatprep.subr.mxu0 0.0
        %634 = vmatpush1.msra.mxu0 0.0
        %635 = vmatprep.subr.mxu0 0.0
        %636 = vmatpush1.msra.mxu0 0.0
        %637 = vmatprep.subr.mxu0 0.0
        %638 = vmatpush1.msra.mxu0 0.0
        %639 = vmatprep.subr.mxu0 0.0
        %640 = vmatpush1.msra.mxu0 0.0
        %641 = vmatprep.subr.mxu0 0.0
        %642 = vmatpush1.msra.mxu0 0.0
        %643 = vmatprep.subr.mxu0 0.0
        %644 = vmatpush1.msra.mxu0 0.0
        %645 = vmatprep.subr.mxu0 0.0
        %646 = vmatpush1.msra.mxu0 0.0
        %647 = vmatprep.subr.mxu0 0.0
        %648 = vmatpush1.msra.mxu0 0.0
        %649 = vmatprep.subr.mxu0 %v551
        %650 = vmatpush1.msra.mxu0 %v550
        %651 = vmatprep.subr.mxu0 %v549
        %652 = vmatpush1.msra.mxu0 %v548
        %653 = vmatprep.subr.mxu0 %v547
        %654 = vmatpush1.msra.mxu0 %v546
        %655 = vmatprep.subr.mxu0 %v545
        %656 = vmatpush1.msra.mxu0 %v544
        %657 = vmatprep.subr.mxu0 %v543
        %658 = vmatpush1.msra.mxu0 %v542
        %659 = vmatprep.subr.mxu0 %v541
        %660 = vmatpush1.msra.mxu0 %v540
        %661 = vmatprep.subr.mxu0 %v539
        %662 = vmatpush1.msra.mxu0 %v538
        %663 = vmatprep.subr.mxu0 %v537
        %664 = vmatpush1.msra.mxu0 %v536
        %665 = vmatprep.subr.mxu0 0.0
        %666 = vmatpush2.msra.mxu0 0.0
        %667 = vmatprep.subr.mxu0 0.0
        %668 = vmatpush2.msra.mxu0 0.0
        %669 = vmatprep.subr.mxu0 0.0
        %670 = vmatpush2.msra.mxu0 0.0
        %671 = vmatprep.subr.mxu0 0.0
        %672 = vmatpush2.msra.mxu0 0.0
        %673 = vmatprep.subr.mxu0 0.0
        %674 = vmatpush2.msra.mxu0 0.0
        %675 = vmatprep.subr.mxu0 0.0
        %676 = vmatpush2.msra.mxu0 0.0
        %677 = vmatprep.subr.mxu0 0.0
        %678 = vmatpush2.msra.mxu0 0.0
        %679 = vmatprep.subr.mxu0 0.0
        %680 = vmatpush2.msra.mxu0 0.0
        %681 = vmatprep.subr.mxu0 0.0
        %682 = vmatpush2.msra.mxu0 0.0
        %683 = vmatprep.subr.mxu0 0.0
        %684 = vmatpush2.msra.mxu0 0.0
        %685 = vmatprep.subr.mxu0 0.0
        %686 = vmatpush2.msra.mxu0 0.0
        %687 = vmatprep.subr.mxu0 0.0
        %688 = vmatpush2.msra.mxu0 0.0
        %689 = vmatprep.subr.mxu0 0.0
        %690 = vmatpush2.msra.mxu0 0.0
        %691 = vmatprep.subr.mxu0 0.0
        %692 = vmatpush2.msra.mxu0 0.0
        %693 = vmatprep.subr.mxu0 0.0
        %694 = vmatpush2.msra.mxu0 0.0
        %695 = vmatprep.subr.mxu0 0.0
        %696 = vmatpush2.msra.mxu0 0.0
        %697 = vmatprep.mubr.f32.mxu0 0.0
        %698 = vmatmul.mubr.f32.gmra.mxu0 %v610
        %v699 = vpop.f32.mrf.mxu0
        %v700 = vadd.f32 %v571, %v699
        %v701 = vpop.f32.mrf.mxu0
        %v702 = vadd.f32 %v571, %v701
        %703 = vmatprep.mubr.f32.mxu0 0.0
        %704 = vmatmul.mubr.f32.gmra.mxu0 %v613
        %v705 = vpop.f32.mrf.mxu0
        %v706 = vadd.f32 %v576, %v705
        %v707 = vpop.f32.mrf.mxu0
        %v708 = vadd.f32 %v576, %v707
        %709 = vmatprep.mubr.f32.mxu0 0.0
        %710 = vmatmul.mubr.f32.gmra.mxu0 %v616
        %v711 = vpop.f32.mrf.mxu0
        %v712 = vadd.f32 %v581, %v711
        %v713 = vpop.f32.mrf.mxu0
        %v714 = vadd.f32 %v581, %v713
        %715 = vmatprep.mubr.f32.mxu0 0.0
        %716 = vmatmul.mubr.f32.gmra.mxu0 %v619
        %v717 = vpop.f32.mrf.mxu0
        %v718 = vadd.f32 %v586, %v717
        %v719 = vpop.f32.mrf.mxu0
        %v720 = vadd.f32 %v586, %v719
        %721 = vmatprep.mubr.f32.mxu0 0.0
        %722 = vmatmul.mubr.f32.gmra.mxu0 %v622
        %v723 = vpop.f32.mrf.mxu0
        %v724 = vadd.f32 %v591, %v723
        %v725 = vpop.f32.mrf.mxu0
        %v726 = vadd.f32 %v591, %v725
        %727 = vmatprep.mubr.f32.mxu0 0.0
        %728 = vmatmul.mubr.f32.gmra.mxu0 %v625
        %v729 = vpop.f32.mrf.mxu0
        %v730 = vadd.f32 %v596, %v729
        %v731 = vpop.f32.mrf.mxu0
        %v732 = vadd.f32 %v596, %v731
        %733 = vmatprep.mubr.f32.mxu0 0.0
        %734 = vmatmul.mubr.f32.gmra.mxu0 %v628
        %v735 = vpop.f32.mrf.mxu0
        %v736 = vadd.f32 %v601, %v735
        %v737 = vpop.f32.mrf.mxu0
        %v738 = vadd.f32 %v601, %v737
        %739 = vmatprep.mubr.f32.mxu0 0.0
        %740 = vmatmul.mubr.f32.gmra.mxu0 %v631
        %v741 = vpop.f32.mrf.mxu0
        %v742 = vadd.f32 %v606, %v741
        %v743 = vpop.f32.mrf.mxu0
        %v744 = vadd.f32 %v606, %v743
        %745 = vdwg.mxu0
        %v746 = vmax.f32 %v700, 0.0
        %v747 = vmax.f32 %v702, 0.0
        %v748 = vmax.f32 %v706, 0.0
        %v749 = vmax.f32 %v708, 0.0
        %v750 = vmax.f32 %v712, 0.0
        %v751 = vmax.f32 %v714, 0.0
        %v752 = vmax.f32 %v718, 0.0
        %v753 = vmax.f32 %v720, 0.0
        %v754 = vmax.f32 %v724, 0.0
        %v755 = vmax.f32 %v726, 0.0
        %v756 = vmax.f32 %v730, 0.0
        %v757 = vmax.f32 %v732, 0.0
        %v758 = vmax.f32 %v736, 0.0
        %v759 = vmax.f32 %v738, 0.0
        %v760 = vmax.f32 %v742, 0.0
        %v761 = vmax.f32 %v744, 0.0
        %v762 = vld [vmem:[%s5] sm:$0x1f]
        %v763 = vld [vmem:[%s6] sm:$0x1f]
        %765 = vset.pattern.permute.xlu0 0
        %766 = vperm.xlu0 %765, %v763
        %v767 = vpop.permute.xlu0 %766
        %v770 = vsel %vm608, %v762, 0
        %772 = vmatprep.subr.mxu0 0.0
        %773 = vmatpush1.msra.mxu0 0.0
        %774 = vmatprep.subr.mxu0 0.0
        %775 = vmatpush1.msra.mxu0 0.0
        %776 = vmatprep.subr.mxu0 0.0
        %777 = vmatpush1.msra.mxu0 0.0
        %778 = vmatprep.subr.mxu0 0.0
        %779 = vmatpush1.msra.mxu0 0.0
        %780 = vmatprep.subr.mxu0 0.0
        %781 = vmatpush1.msra.mxu0 0.0
        %782 = vmatprep.subr.mxu0 0.0
        %783 = vmatpush1.msra.mxu0 0.0
        %784 = vmatprep.subr.mxu0 0.0
        %785 = vmatpush1.msra.mxu0 0.0
        %786 = vmatprep.subr.mxu0 0.0
        %787 = vmatpush1.msra.mxu0 0.0
        %788 = vmatprep.subr.mxu0 %v761
        %789 = vmatpush1.msra.mxu0 %v760
        %790 = vmatprep.subr.mxu0 %v759
        %791 = vmatpush1.msra.mxu0 %v758
        %792 = vmatprep.subr.mxu0 %v757
        %793 = vmatpush1.msra.mxu0 %v756
        %794 = vmatprep.subr.mxu0 %v755
        %795 = vmatpush1.msra.mxu0 %v754
        %796 = vmatprep.subr.mxu0 %v753
        %797 = vmatpush1.msra.mxu0 %v752
        %798 = vmatprep.subr.mxu0 %v751
        %799 = vmatpush1.msra.mxu0 %v750
        %800 = vmatprep.subr.mxu0 %v749
        %801 = vmatpush1.msra.mxu0 %v748
        %802 = vmatprep.subr.mxu0 %v747
        %803 = vmatpush1.msra.mxu0 %v746
        %804 = vmatprep.subr.mxu0 0.0
        %805 = vmatpush2.msra.mxu0 0.0
        %806 = vmatprep.subr.mxu0 0.0
        %807 = vmatpush2.msra.mxu0 0.0
        %808 = vmatprep.subr.mxu0 0.0
        %809 = vmatpush2.msra.mxu0 0.0
        %810 = vmatprep.subr.mxu0 0.0
        %811 = vmatpush2.msra.mxu0 0.0
        %812 = vmatprep.subr.mxu0 0.0
        %813 = vmatpush2.msra.mxu0 0.0
        %814 = vmatprep.subr.mxu0 0.0
        %815 = vmatpush2.msra.mxu0 0.0
        %816 = vmatprep.subr.mxu0 0.0
        %817 = vmatpush2.msra.mxu0 0.0
        %818 = vmatprep.subr.mxu0 0.0
        %819 = vmatpush2.msra.mxu0 0.0
        %820 = vmatprep.subr.mxu0 0.0
        %821 = vmatpush2.msra.mxu0 0.0
        %822 = vmatprep.subr.mxu0 0.0
        %823 = vmatpush2.msra.mxu0 0.0
        %824 = vmatprep.subr.mxu0 0.0
        %825 = vmatpush2.msra.mxu0 0.0
        %826 = vmatprep.subr.mxu0 0.0
        %827 = vmatpush2.msra.mxu0 0.0
        %828 = vmatprep.subr.mxu0 0.0
        %829 = vmatpush2.msra.mxu0 0.0
        %830 = vmatprep.subr.mxu0 0.0
        %831 = vmatpush2.msra.mxu0 0.0
        %832 = vmatprep.subr.mxu0 0.0
        %833 = vmatpush2.msra.mxu0 0.0
        %834 = vmatprep.subr.mxu0 0.0
        %835 = vmatpush2.msra.mxu0 0.0
        %836 = vmatprep.mubr.f32.mxu0 0.0
        %837 = vmatmul.mubr.f32.gmra.mxu0 %v770
        %v838 = vpop.f32.mrf.mxu0
        %v839 = vadd.f32 %v767, %v838
        %v840 = vpop.f32.mrf.mxu0
        %v841 = vadd.f32 %v767, %v840
        %842 = vdwg.mxu0
        %v843 = vtanh.pop %v839
        %v844 = vtanh.pop %v841
        %v845 = vld [vmem:[%s7] sm:$0xf]
        %v846 = vld [vmem:[%s7 + $0x4] sm:$0x1]
        %v847 = vsub.f32 %v340, %v843
        %v848 = vsub.f32 %v341, %v844
        %v849 = vmul.f32 %v847, %v847
        %v850 = vmul.f32 %v848, %v848
        %852 = vset.pattern.permute.xlu0 0
        %853 = vperm.xlu0 %852, %v845
        %v854 = vpop.permute.xlu0 %853
        %v856 = vmul.f32 %v849, %v854
        %v857 = vmul.f32 %v850, %v854
        %vm858 = vcmask 1043456
        %v859 = vsel %vm858, %v856, 0.0
        %v860 = vrot.slane %v859, 4
        %v861 = vadd.f32 %v859, %v860
        %v862 = vrot.slane %v861, 2
        %v863 = vadd.f32 %v861, %v862
        %v864 = vrot.slane %v863, 1
        %v865 = vadd.f32 %v863, %v864
        %v866 = vsel %vm858, %v857, 0.0
        %v867 = vrot.slane %v866, 4
        %v868 = vadd.f32 %v866, %v867
        %v869 = vrot.slane %v868, 2
        %v870 = vadd.f32 %v868, %v869
        %v871 = vrot.slane %v870, 1
        %v872 = vadd.f32 %v870, %v871
        %v873 = vmul.f32 %v865, 0.5
        %v874 = vmul.f32 %v872, 0.5
        %876 = vset.pattern.permute.xlu0 0
        %877 = vperm.xlu0 %876, %v846
        %v878 = vpop.permute.xlu0 %877
        %v880 = vsub.f32 %v878, %v873
        %v881 = vsub.f32 %v878, %v874
        %v884 = vrot.slane %v839, 3
        %v885 = vrot.slane %v841, 3
        %vm888 = vcmask 1040384
        %v889 = vsel %vm888, %v880, %v884
        %v890 = vsel %vm888, %v881, %v885
        %v893 = vcombine.low %v889, %v890
        %v895 = vunpack.c.l.s4 1983009808
        %v896 = vunpack.c.0.s8 %v895
        %v897 = vlaneseq
        %v898 = vshrl.u32 %v897, 7
        %v899 = vsub.s32 %v896, %v898
        %v900 = vrot.slane %v893, %v899
        %902 = vst [vmem:[%s333] sm:$0xf] %v900
        %s903 = sand.u32 %s203, 1
        %s904 = scalar_lea.sflag [#allocation4], %s903
        %s905 = sand.u32 %s203, 1
        %s906 = smul.addr %s905, 4
        %s907 = scalar_lea.vmem [#allocation3], %s906
        // Predicated region
        $region76: #{tpu_custom_call.1} parent=70 // pred_check
          %p908 = pneg %p213
        $region77: #{tpu_custom_call.1} parent=70 // pred_check_branch
          %910 = sbr.rel (%p908) target = $region79
        $region78: #{tpu_custom_call.1} parent=70 // pred_region
          %s911 = smul.u32 2, %s22
          %s913 = ssub.s32 64, 64
          %914 = vsyncadd %s904, %s913
          %s915 = smul.addr %s911, 32
          %s916 = scalar_lea.hbm %s8, %s915
          %s918 = sshll.u32 %s907, 4
          %s919 = int_to_ptr.vmem [resolvable:$true] %s918
          %921 = dma.vmem_to_hbm [thread:$0]  %s919, 64, %s916, %s904
        $region79: #{tpu_custom_call.1} parent=70 // pred_fallthru
          _
      $region71: #{tpu_custom_call.1} parent=5 // pred_fallthru
        _
      %p922 = scmp.le.s32.totalorder 2, %s17
      // Predicated region
      $region80: #{tpu_custom_call.1} parent=5 // pred_check
        %p923 = pneg %p922
      $region81: #{tpu_custom_call.1} parent=5 // pred_check_branch
        %925 = sbr.rel (%p923) target = $region83
      $region82: #{tpu_custom_call.1} parent=5 // pred_region
        %s926 = ssub.s32 %s17, 2
        // Predicated region
        $region84: #{tpu_custom_call.1} parent=82 // pred_check
          %p927 = pneg %p219
        $region85: #{tpu_custom_call.1} parent=82 // pred_check_branch
          %929 = sbr.rel (%p927) target = $region87
        $region86: #{tpu_custom_call.1} parent=82 // pred_region
          %s930 = sand.u32 %s204, 1
          %s931 = scalar_lea.sflag [#allocation4], %s930
          %s932 = sand.u32 %s204, 1
          %s933 = smul.addr %s932, 4
          %s934 = scalar_lea.vmem [#allocation3], %s933
          %935 = dma.done %s931, 64
        $region87: #{tpu_custom_call.1} parent=82 // pred_fallthru
          _
      $region83: #{tpu_custom_call.1} parent=5 // pred_fallthru
        _
    $region6: #{tpu_custom_call.1} parent=1 // loop_footer
      %s21 = sadd.s32 1, %s17
    $region7: #{tpu_custom_call.1} parent=1 // loop_footer_branch
      %16 = sbr.rel target = $region3
    $region8: #{tpu_custom_call.1} parent=1 // loop_exit
      _
    %936 = vsyncpa [#allocation4], 1
    %s937 = scalar_lea.sflag [#allocation4], 1
    %938 = vsyncpa %s937, 1

</llo_original>
